<compile_context>
chip_gen: v7x
topology: tpu7x:2x2x1
jax: 0.10.0
libtpu: 0.0.40
codegen_flags: <defaults>
</compile_context>

<pallas_src>
import functools

import jax
import jax.numpy as jnp
from jax.experimental import pallas as pl
from jax.experimental.pallas import tpu as pltpu


def _round_up(x: int, m: int) -> int:
    return ((x + m - 1) // m) * m


def linear_kernel(x_ref, w_ref, b_ref, o_ref):
    # One M-tile per grid step. W / b have a constant block index across the
    # grid, so Pallas keeps them resident in VMEM (no re-DMA per step).
    acc = jnp.dot(x_ref[...], w_ref[...], preferred_element_type=jnp.float32)
    o_ref[...] = (acc + b_ref[...]).astype(o_ref.dtype)


@functools.partial(jax.jit, static_argnames=("block_m",))
def linear_forward(x, weight, bias, *, block_m=1024):
    """nn.Linear forward: out = x @ weight.T + bias.

    x:      [M, K] float32
    weight: [N, K] float32   (PyTorch nn.Linear layout)
    bias:   [N]    float32
    returns [M, N] float32
    """
    M, K = x.shape
    N, K2 = weight.shape
    assert K == K2 and bias.shape == (N,)

    # ---- wrapper-side layout plumbing (pure data movement, fused by XLA) ----
    # Lane-dense output: pad N up to a multiple of 128 -> unmasked full-lane
    # stores inside the kernel; slice the real columns back afterwards.
    N_pad = _round_up(N, 128)
    # M-tile: whole (sublane-rounded) batch, capped so the per-step VMEM
    # footprint stays small on every generation (incl. v7x's 64 MiB VMEM).
    tm = min(_round_up(M, 8), block_m)
    M_pad = _round_up(M, tm)

    w_t = jnp.zeros((K, N_pad), x.dtype).at[:, :N].set(weight.T)   # [K, N_pad]
    b_p = jnp.zeros((1, N_pad), x.dtype).at[:, :N].set(bias[None]) # [1, N_pad]
    x_p = x if M_pad == M else jnp.zeros((M_pad, K), x.dtype).at[:M].set(x)

    grid = (M_pad // tm,)

    cost = pl.CostEstimate(
        flops=2 * M_pad * K * N_pad,
        transcendentals=0,
        bytes_accessed=4 * (M_pad * K + K * N_pad + N_pad + M_pad * N_pad),
    )

    # Per-step VMEM: double-buffered x tile + double-buffered out tile,
    # plus the resident W and b. Generous 4x headroom, capped at 32 MiB.
    tile_bytes = 4 * (2 * tm * K + 2 * tm * N_pad + K * N_pad + N_pad)
    vmem_limit = min(max(4 * tile_bytes, 8 << 20), 32 << 20)

    out_padded = pl.pallas_call(
        linear_kernel,
        out_shape=jax.ShapeDtypeStruct((M_pad, N_pad), x.dtype),
        grid_spec=pl.GridSpec(
            grid=grid,
            in_specs=[
                pl.BlockSpec((tm, K), lambda i: (i, 0)),      # x: streams over M
                pl.BlockSpec((K, N_pad), lambda i: (0, 0)),   # W: resident
                pl.BlockSpec((1, N_pad), lambda i: (0, 0)),   # b: resident
            ],
            out_specs=pl.BlockSpec((tm, N_pad), lambda i: (i, 0)),
        ),
        compiler_params=pltpu.CompilerParams(
            # Independent M-tiles -> shard across the 2 TCs on v7x megacore.
            dimension_semantics=("parallel",),
            vmem_limit_bytes=vmem_limit,
        ),
        cost_estimate=cost,
    )(x_p, w_t, b_p)

    return out_padded[:M, :N]


if __name__ == "__main__":
    # Small shapes consistent with nn.Linear(input_dim, output_dim).
    batch, input_dim, output_dim = 8, 32, 16

    key = jax.random.PRNGKey(0)
    kx, kw, kb = jax.random.split(key, 3)

    # Deterministic parameters (mimics nn.Linear's uniform init range).
    bound = 1.0 / jnp.sqrt(input_dim)
    x = jax.random.normal(kx, (batch, input_dim), dtype=jnp.float32)
    weight = jax.random.uniform(kw, (output_dim, input_dim), jnp.float32,
                                minval=-bound, maxval=bound)  # PyTorch layout
    bias = jax.random.uniform(kb, (output_dim,), jnp.float32,
                              minval=-bound, maxval=bound)

    out = jax.block_until_ready(linear_forward(x, weight, bias))

    # Sanity check against plain JAX reference.
    ref = x @ weight.T + bias
    assert out.shape == (batch, output_dim)
    assert jnp.allclose(out, ref, atol=1e-5, rtol=1e-5)

    print("KERNEL_OK")
</pallas_src>

<mosaic_0001>
module attributes {stable_mosaic.version = 11 : i64} {
  func.func @linear_kernel(%arg0: i32, %arg1: memref<8x32xf32, #tpu.memory_space<vmem>>, %arg2: memref<32x128xf32, #tpu.memory_space<vmem>>, %arg3: memref<1x128xf32, #tpu.memory_space<vmem>>, %arg4: memref<8x128xf32, #tpu.memory_space<vmem>>) attributes {dimension_semantics = [#tpu.dimension_semantics<parallel>], iteration_bounds = array<i64: 1>, scalar_prefetch = 0 : i64, scratch_operands = 0 : i64, tpu.core_type = #tpu.core_type<tc>, window_params = [{transform_indices = @transform_0, window_bounds = array<i64: 8, 32>}, {pipeline_mode = #tpu.pipeline_mode<synchronous>, transform_indices = @transform_1, window_bounds = array<i64: 32, 128>}, {pipeline_mode = #tpu.pipeline_mode<synchronous>, transform_indices = @transform_2, window_bounds = array<i64: 1, 128>}, {transform_indices = @transform_3, window_bounds = array<i64: 8, 128>}]} {
    %c0 = arith.constant 0 : index
    %c0_0 = arith.constant 0 : index
    %0 = vector.load %arg1[%c0, %c0_0] : memref<8x32xf32, #tpu.memory_space<vmem>>, vector<8x32xf32>
    %c0_1 = arith.constant 0 : index
    %c0_2 = arith.constant 0 : index
    %1 = vector.load %arg2[%c0_1, %c0_2] : memref<32x128xf32, #tpu.memory_space<vmem>>, vector<32x128xf32>
    %cst = arith.constant dense<0.000000e+00> : vector<8x128xf32>
    %2 = tpu.matmul %0, %1, %cst {dimension_numbers = #tpu.dot_dimension_numbers<[1], [0], [0], [1], [0, 0, 1, 1], [], []>} : vector<8x32xf32>, vector<32x128xf32>, vector<8x128xf32> -> vector<8x128xf32>
    %c0_3 = arith.constant 0 : index
    %c0_4 = arith.constant 0 : index
    %3 = vector.load %arg3[%c0_3, %c0_4] : memref<1x128xf32, #tpu.memory_space<vmem>>, vector<1x128xf32>
    %4 = vector.broadcast %3 : vector<1x128xf32> to vector<8x128xf32>
    %5 = arith.addf %2, %4 : vector<8x128xf32>
    %c0_5 = arith.constant 0 : index
    %c0_6 = arith.constant 0 : index
    %6 = vector.load %arg4[%c0_5, %c0_6] : memref<8x128xf32, #tpu.memory_space<vmem>>, vector<8x128xf32>
    tpu.vector_store %arg4[%c0_5, %c0_6], %5 {strides = array<i32>} : memref<8x128xf32, #tpu.memory_space<vmem>>, vector<8x128xf32>,
    return
  }
  func.func @transform_0(%arg0: i32) -> (i32, i32) {
    %c0_i32 = arith.constant 0 : i32
    %c0_i32_0 = arith.constant 0 : i32
    return %arg0, %c0_i32 : i32, i32
  }
  func.func @transform_1(%arg0: i32) -> (i32, i32) {
    %c0_i32 = arith.constant 0 : i32
    %c0_i32_0 = arith.constant 0 : i32
    %c0_i32_1 = arith.constant 0 : i32
    return %c0_i32, %c0_i32_0 : i32, i32
  }
  func.func @transform_2(%arg0: i32) -> (i32, i32) {
    %c0_i32 = arith.constant 0 : i32
    %c0_i32_0 = arith.constant 0 : i32
    %c0_i32_1 = arith.constant 0 : i32
    return %c0_i32, %c0_i32_0 : i32, i32
  }
  func.func @transform_3(%arg0: i32) -> (i32, i32) {
    %c0_i32 = arith.constant 0 : i32
    %c0_i32_0 = arith.constant 0 : i32
    return %arg0, %c0_i32 : i32, i32
  }
}

</mosaic_0001>

<llo_original>
// kernel: linear_forward.1
$region0: #{linear_forward.1}
  #allocation0 [shape = 'u32[]', space=smem, size = 0x4, offset = 0x4, fixed_abs, tag = 'smem constant byte address 0x4 - core index']
  #allocation1 [shape = 'u32[144,128]{1,0:T(1,128)}', space=vmem, size = 0x12000, scoped, tag = 'internal scratch']
  %s0 = inlined_call_operand.vmem [shape: f32[8,32], index: 0, kind: input, shape index: {}]
  %s1 = inlined_call_operand.vmem [shape: f32[32,128], index: 1, kind: input, shape index: {}]
  %s2 = inlined_call_operand.vmem [shape: f32[1,128], index: 2, kind: input, shape index: {}]
  %s3 = inlined_call_operand.hbm [shape: f32[8,128], index: 3, kind: output, shape index: {}]
  %s4 = sld [smem:[#allocation0]]
  $region22: #{linear_forward.1} parent=0
    _
  %s6 = ssub.s32 1, %s4
  %s7 = scalar_select 0, %s6, %s4
  $region1: #{linear_forward.1} parent=0
    #allocation2 [shape = 'u8[4096]{0}', space=vmem, size = 0x1000, scoped, tag = 'output window, operand 0, single buffered']
    #allocation3 [shape = 's32[1]{0}', space=sflag, size = 0x4, scoped, tag = 'scoped memory for linear_forward.1']
    %8 = vsyncpa [#allocation3], 0
    // Predicated region
    $region2: #{linear_forward.1} parent=1 // pred_check
      _
    $region3: #{linear_forward.1} parent=1 // pred_check_branch
      %10 = sbr.rel (0) target = $region5
    $region4: #{linear_forward.1} parent=1 // pred_region
      _
    $region5: #{linear_forward.1} parent=1 // pred_fallthru
      _
    // Predicated region
    $region6: #{linear_forward.1} parent=1 // pred_check
      _
    $region7: #{linear_forward.1} parent=1 // pred_check_branch
      %12 = sbr.rel (0) target = $region9
    $region8: #{linear_forward.1} parent=1 // pred_region
      _
    $region9: #{linear_forward.1} parent=1 // pred_fallthru
      _
    // Predicated region
    $region10: #{linear_forward.1} parent=1 // pred_check
      _
    $region11: #{linear_forward.1} parent=1 // pred_check_branch
      %14 = sbr.rel (0) target = $region13
    $region12: #{linear_forward.1} parent=1 // pred_region
      _
    $region13: #{linear_forward.1} parent=1 // pred_fallthru
      _
    %v15 = vld [vmem:[%s0] sm:$0xff]
    %v16 = vld [vmem:[%s1] sm:$0xff]
    %v17 = vld [vmem:[%s1 + $0x8] sm:$0xff]
    %v18 = vld [vmem:[%s1 + $0x10] sm:$0xff]
    %v19 = vld [vmem:[%s1 + $0x18] sm:$0xff]
    %v20 = vld [vmem:[%s2] sm:$0x1]
    %v22 = vlaneseq
    %v23 = vshrl.u32 %v22, 7
    %v24 = vsub.s32 0, %v23
    %v25 = vrot.slane %v20, %v24
    %vm27 = vcmask 261120
    %v29 = vsel %vm27, %v15, 0
    %31 = vmatprep.subr.mxu0 0.0
    %32 = vmatpush1.msra.mxu0 %v16
    %33 = vmatprep.subr.mxu0 0.0
    %34 = vmatpush1.msra.mxu0 %v17
    %35 = vmatprep.subr.mxu0 0.0
    %36 = vmatpush1.msra.mxu0 %v18
    %37 = vmatprep.subr.mxu0 0.0
    %38 = vmatpush1.msra.mxu0 %v19
    %39 = vmatprep.subr.mxu0 0.0
    %40 = vmatpush1.msra.mxu0 0.0
    %41 = vmatprep.subr.mxu0 0.0
    %42 = vmatpush1.msra.mxu0 0.0
    %43 = vmatprep.subr.mxu0 0.0
    %44 = vmatpush1.msra.mxu0 0.0
    %45 = vmatprep.subr.mxu0 0.0
    %46 = vmatpush1.msra.mxu0 0.0
    %47 = vmatprep.subr.mxu0 0.0
    %48 = vmatpush1.msra.mxu0 0.0
    %49 = vmatprep.subr.mxu0 0.0
    %50 = vmatpush1.msra.mxu0 0.0
    %51 = vmatprep.subr.mxu0 0.0
    %52 = vmatpush1.msra.mxu0 0.0
    %53 = vmatprep.subr.mxu0 0.0
    %54 = vmatpush1.msra.mxu0 0.0
    %55 = vmatprep.subr.mxu0 0.0
    %56 = vmatpush1.msra.mxu0 0.0
    %57 = vmatprep.subr.mxu0 0.0
    %58 = vmatpush1.msra.mxu0 0.0
    %59 = vmatprep.subr.mxu0 0.0
    %60 = vmatpush1.msra.mxu0 0.0
    %61 = vmatprep.subr.mxu0 0.0
    %62 = vmatpush1.msra.mxu0 0.0
    %63 = vmatprep.subr.mxu0 0.0
    %64 = vmatpush1.msra.mxu0 0.0
    %65 = vmatprep.subr.mxu0 0.0
    %66 = vmatpush1.msra.mxu0 0.0
    %67 = vmatprep.subr.mxu0 0.0
    %68 = vmatpush1.msra.mxu0 0.0
    %69 = vmatprep.subr.mxu0 0.0
    %70 = vmatpush1.msra.mxu0 0.0
    %71 = vmatprep.subr.mxu0 0.0
    %72 = vmatpush1.msra.mxu0 0.0
    %73 = vmatprep.subr.mxu0 0.0
    %74 = vmatpush1.msra.mxu0 0.0
    %75 = vmatprep.subr.mxu0 0.0
    %76 = vmatpush1.msra.mxu0 0.0
    %77 = vmatprep.subr.mxu0 0.0
    %78 = vmatpush1.msra.mxu0 0.0
    %79 = vmatprep.subr.mxu0 0.0
    %80 = vmatpush1.msra.mxu0 0.0
    %81 = vmatprep.subr.mxu0 0.0
    %82 = vmatpush1.msra.mxu0 0.0
    %83 = vmatprep.subr.mxu0 0.0
    %84 = vmatpush1.msra.mxu0 0.0
    %85 = vmatprep.subr.mxu0 0.0
    %86 = vmatpush1.msra.mxu0 0.0
    %87 = vmatprep.subr.mxu0 0.0
    %88 = vmatpush1.msra.mxu0 0.0
    %89 = vmatprep.subr.mxu0 0.0
    %90 = vmatpush1.msra.mxu0 0.0
    %91 = vmatprep.subr.mxu0 0.0
    %92 = vmatpush1.msra.mxu0 0.0
    %93 = vmatprep.subr.mxu0 0.0
    %94 = vmatpush1.msra.mxu0 0.0
    %95 = vmatprep.mubr.f32.mxu0 0.0
    %96 = vmatmul.mubr.f32.gmra.mrb[0].mxu0 %v29
    %v97 = vpop.f32.mrb[0].mxu0
    %v98 = vadd.f32 %v25, %v97
    %v99 = vpop.f32.mrb[0].mxu0
    %100 = vdwg.mxu0
    %101 = vst [vmem:[#allocation2] sm:$0xff] %v98
    // Predicated region
    $region14: #{linear_forward.1} parent=1 // pred_check
      _
    $region15: #{linear_forward.1} parent=1 // pred_check_branch
      %103 = sbr.rel (0) target = $region17
    $region16: #{linear_forward.1} parent=1 // pred_region
      %s105 = ssub.s32 128, 128
      %106 = vsyncadd [#allocation3], %s105
      %s108 = sshll.u32 [#allocation2], 4
      %s109 = int_to_ptr.vmem [resolvable:$true] %s108
      %111 = dma.vmem_to_hbm [thread:$0]  %s109, 128, %s3, [#allocation3]
    $region17: #{linear_forward.1} parent=1 // pred_fallthru
      _
    // Predicated region
    $region18: #{linear_forward.1} parent=1 // pred_check
      _
    $region19: #{linear_forward.1} parent=1 // pred_check_branch
      %113 = sbr.rel (0) target = $region21
    $region20: #{linear_forward.1} parent=1 // pred_region
      %114 = dma.done [#allocation3], 128
    $region21: #{linear_forward.1} parent=1 // pred_fallthru
      _
    %115 = vsyncpa [#allocation3], 1

</llo_original>
